<compile_context>
chip_gen: v6e
topology: v6e:2x2x1
jax: 0.10.0
libtpu: 0.0.40
codegen_flags: <defaults>
</compile_context>

<pallas_src>
import math
import functools

import jax
import jax.numpy as jnp
from jax.experimental import pallas as pl
from jax.experimental.pallas import tpu as pltpu


def _round_up(x, m):
    return ((x + m - 1) // m) * m


def _pick_tile(total, cap):
    """Largest multiple of 128 that divides `total` (itself a multiple of 128)
    and does not exceed `cap`."""
    best = 128
    t = 128
    while t <= min(total, cap):
        if total % t == 0:
            best = t
        t += 128
    return best


@functools.lru_cache(maxsize=1)
def _vmem_limit_bytes():
    # v5e/v6e: 128 MiB physical -> 64 MiB scoped; v7x: 64 MiB physical -> 32 MiB.
    try:
        cap = pltpu.get_tpu_info().vmem_capacity_bytes
    except Exception:
        cap = 64 * 1024 * 1024
    return int(min(cap // 2, 64 * 1024 * 1024))


def _pad2d(a, rows, cols, dtype):
    """Cast + zero-pad; skips the extra full-array copy when nothing changes."""
    a = a.astype(dtype)
    if a.shape == (rows, cols):
        return a
    return jnp.zeros((rows, cols), dtype).at[:a.shape[0], :a.shape[1]].set(a)


def _choose_node_tiling(n):
    """n_pad multiple of 128; tm/tk divide n_pad; tm mult of 8, tk mult of 128."""
    n_pad = _round_up(n, 128)
    if n_pad <= 512:
        # Split rows in two so the "parallel" axis feeds both v7x TensorCores.
        tm = max(n_pad // 2, 8)       # n_pad is a multiple of 128 -> tm >= 64
        tk = n_pad
        return n_pad, tm, tk
    tm = _pick_tile(n_pad, 512)
    tk = _pick_tile(n_pad, 1024)
    return n_pad, tm, tk


# ---------------------------------------------------------------------------
# Kernel 1: support = (x @ W1) @ W2, tiled (rows x in_features) with an f32
# hidden accumulator; the @W2 happens once per row tile on the last K step.
# ---------------------------------------------------------------------------
def _support_kernel(x_ref, w1_ref, w2_ref, out_ref, h_ref):
    k = pl.program_id(1)

    @pl.when(k == 0)
    def _():
        h_ref[...] = jnp.zeros_like(h_ref)

    h_ref[...] += jnp.dot(x_ref[...], w1_ref[...],
                          preferred_element_type=jnp.float32)

    @pl.when(k == pl.num_programs(1) - 1)
    def _():
        out_ref[...] = jnp.dot(h_ref[...].astype(w2_ref.dtype), w2_ref[...],
                               preferred_element_type=jnp.float32
                               ).astype(out_ref.dtype)


# ---------------------------------------------------------------------------
# Kernel 2: out = adj @ support (+ bias), accumulating directly into the f32
# output block (its index_map is constant along k -> stays VMEM-resident).
# ---------------------------------------------------------------------------
def _make_spmm_kernel(tk, use_bias, resident_support):
    def kernel(adj_ref, s_ref, *rest):
        if use_bias:
            b_ref, out_ref = rest
        else:
            b_ref = None
            (out_ref,) = rest

        k = pl.program_id(1)

        if resident_support:
            # support is a single resident block; take this step's k-chunk.
            s = s_ref[pl.ds(pl.multiple_of(k * tk, 128), tk), :]
        else:
            s = s_ref[...]
        part = jnp.dot(adj_ref[...], s, preferred_element_type=jnp.float32)

        @pl.when(k == 0)
        def _():
            out_ref[...] = part

        @pl.when(k > 0)
        def _():
            out_ref[...] += part

        if use_bias:
            @pl.when(k == pl.num_programs(1) - 1)
            def _():
                out_ref[...] += b_ref[...]

    return kernel


@functools.partial(jax.jit, static_argnames=("use_bias", "stream_dtype"))
def gcn_compress_forward(x, adj, w1, w2, bias=None, *, use_bias=False,
                         stream_dtype=jnp.bfloat16):
    n, in_features = x.shape
    mid = w1.shape[1]
    out_features = w2.shape[1]

    # ---- padded, lane-/sublane-friendly shapes -----------------------------
    n_pad, tm, tk = _choose_node_tiling(n)
    in_p = _round_up(in_features, 128)
    mid_p = _round_up(mid, 128)
    f_p = _round_up(out_features, 128)
    tk_in = _pick_tile(in_p, 512)

    x_p = _pad2d(x, n_pad, in_p, stream_dtype)
    w1_p = _pad2d(w1, in_p, mid_p, stream_dtype)
    w2_p = _pad2d(w2, mid_p, f_p, stream_dtype)
    adj_p = _pad2d(adj, n_pad, n_pad, stream_dtype)

    vmem_limit = _vmem_limit_bytes()

    # ---- kernel 1: support = (x @ W1) @ W2 ---------------------------------
    support = pl.pallas_call(
        _support_kernel,
        out_shape=jax.ShapeDtypeStruct((n_pad, f_p), stream_dtype),
        grid=(n_pad // tm, in_p // tk_in),
        in_specs=[
            pl.BlockSpec((tm, tk_in), lambda i, k: (i, k)),     # x tile
            pl.BlockSpec((tk_in, mid_p), lambda i, k: (k, 0)),  # W1 slab
            pl.BlockSpec((mid_p, f_p), lambda i, k: (0, 0)),    # W2 (resident)
        ],
        out_specs=pl.BlockSpec((tm, f_p), lambda i, k: (i, 0)),
        scratch_shapes=[pltpu.VMEM((tm, mid_p), jnp.float32)],
        compiler_params=pltpu.CompilerParams(
            dimension_semantics=("parallel", "arbitrary"),
            vmem_limit_bytes=vmem_limit),
    )(x_p, w1_p, w2_p)

    # ---- kernel 2: out = adj @ support (+ bias) ----------------------------
    support_bytes = n_pad * f_p * jnp.dtype(stream_dtype).itemsize
    resident_support = support_bytes <= 8 * 1024 * 1024

    if resident_support:
        # One resident block: support is fetched from HBM exactly once.
        s_spec = pl.BlockSpec((n_pad, f_p), lambda i, k: (0, 0))
    else:
        # Fallback for huge graphs: stream the k-chunk (tm is large enough
        # that the re-read overhead stays small).
        s_spec = pl.BlockSpec((tk, f_p), lambda i, k: (k, 0))

    in_specs = [pl.BlockSpec((tm, tk), lambda i, k: (i, k)), s_spec]
    inputs = [adj_p, support]
    if use_bias:
        b_p = jnp.zeros((1, f_p), jnp.float32).at[0, :out_features].set(
            bias.astype(jnp.float32))
        in_specs.append(pl.BlockSpec((1, f_p), lambda i, k: (0, 0)))
        inputs.append(b_p)

    out_p = pl.pallas_call(
        _make_spmm_kernel(tk, use_bias, resident_support),
        out_shape=jax.ShapeDtypeStruct((n_pad, f_p), jnp.float32),
        grid=(n_pad // tm, n_pad // tk),
        in_specs=in_specs,
        out_specs=pl.BlockSpec((tm, f_p), lambda i, k: (i, 0)),
        compiler_params=pltpu.CompilerParams(
            dimension_semantics=("parallel", "arbitrary"),
            vmem_limit_bytes=vmem_limit),
    )(*inputs)

    return out_p[:n, :out_features]


def init_params(key, in_features, mid, out_features, use_bias):
    """Mimics reset_parameters(): W1 ~ U(+-1/sqrt(mid)),
    W2 / bias ~ U(+-1/sqrt(out_features))."""
    k1, k2, k3 = jax.random.split(key, 3)
    stdv1 = 1.0 / math.sqrt(mid)
    stdv2 = 1.0 / math.sqrt(out_features)
    w1 = jax.random.uniform(k1, (in_features, mid), jnp.float32, -stdv1, stdv1)
    w2 = jax.random.uniform(k2, (mid, out_features), jnp.float32, -stdv2, stdv2)
    b = (jax.random.uniform(k3, (out_features,), jnp.float32, -stdv2, stdv2)
         if use_bias else None)
    return w1, w2, b


if __name__ == "__main__":
    # Small shapes consistent with the module's forward (graph with N nodes).
    # NOTE: at these demo sizes the kernel is launch-overhead dominated; the
    # tiling / residency / bf16 streaming above is what matters at real sizes.
    N = 16
    IN_FEATURES = 32
    MID = 16
    OUT_FEATURES = 8

    key = jax.random.PRNGKey(0)
    kx, kadj, kparam = jax.random.split(key, 3)

    x = jax.random.normal(kx, (N, IN_FEATURES), jnp.float32)

    # Dense stand-in for the sparse adjacency torch.spmm would consume
    # (symmetric, self-loops, row-normalized).
    # TODO(synk): a faithful sparse (CSR) spmm would use scalar-prefetched row
    # pointers + DMA gather; dense adj is mathematically identical.
    a_raw = (jax.random.uniform(kadj, (N, N)) > 0.7).astype(jnp.float32)
    a_sym = jnp.clip(a_raw + a_raw.T + jnp.eye(N, dtype=jnp.float32), 0.0, 1.0)
    adj = a_sym / jnp.sum(a_sym, axis=1, keepdims=True)

    w1, w2, b = init_params(kparam, IN_FEATURES, MID, OUT_FEATURES, True)
    ref = adj @ ((x @ w1) @ w2) + b

    # --- bias=True, default bf16 streaming (production path) ---
    out_bf16 = gcn_compress_forward(x, adj, w1, w2, b, use_bias=True)
    out_bf16 = jax.block_until_ready(out_bf16)
    assert out_bf16.shape == (N, OUT_FEATURES)
    assert jnp.allclose(out_bf16, ref, atol=5e-2, rtol=5e-2), "bf16 bias path mismatch"

    # --- bias=True, f32 streaming (tight numeric check) ---
    out_f32 = gcn_compress_forward(x, adj, w1, w2, b, use_bias=True,
                                   stream_dtype=jnp.float32)
    out_f32 = jax.block_until_ready(out_f32)
    assert jnp.allclose(out_f32, ref, atol=1e-4, rtol=1e-4), "f32 bias path mismatch"

    # --- bias=False path (module default), f32 check ---
    out_nb = gcn_compress_forward(x, adj, w1, w2, None, use_bias=False,
                                  stream_dtype=jnp.float32)
    out_nb = jax.block_until_ready(out_nb)
    ref_nb = adj @ ((x @ w1) @ w2)
    assert jnp.allclose(out_nb, ref_nb, atol=1e-4, rtol=1e-4), "no-bias path mismatch"

    print("KERNEL_OK")
</pallas_src>

<mosaic_0001>
module attributes {stable_mosaic.version = 11 : i64} {
  func.func @_support_kernel(%arg0: i32, %arg1: i32, %arg2: memref<64x128xbf16, #tpu.memory_space<vmem>>, %arg3: memref<128x128xbf16, #tpu.memory_space<vmem>>, %arg4: memref<128x128xbf16, #tpu.memory_space<vmem>>, %arg5: memref<64x128xbf16, #tpu.memory_space<vmem>>, %arg6: memref<64x128xf32, #tpu.memory_space<vmem>>) attributes {dimension_semantics = [#tpu.dimension_semantics<parallel>, #tpu.dimension_semantics<arbitrary>], iteration_bounds = array<i64: 2, 1>, scalar_prefetch = 0 : i64, scratch_operands = 1 : i64, tpu.core_type = #tpu.core_type<tc>, window_params = [{transform_indices = @transform_0, window_bounds = array<i64: 64, 128>}, {transform_indices = @transform_1, window_bounds = array<i64: 128, 128>}, {pipeline_mode = #tpu.pipeline_mode<synchronous>, transform_indices = @transform_2, window_bounds = array<i64: 128, 128>}, {transform_indices = @transform_3, window_bounds = array<i64: 64, 128>}]} {
    %c0_i32 = arith.constant 0 : i32
    %0 = arith.cmpi eq, %arg1, %c0_i32 : i32
    %1 = arith.extui %0 : i1 to i32
    %c0_i32_0 = arith.constant 0 : i32
    %2 = arith.cmpi ne, %1, %c0_i32_0 : i32
    scf.if %2 {
      %cst_10 = arith.constant 0.000000e+00 : f32
      %12 = vector.broadcast %cst_10 : f32 to vector<64x128xf32>
      %c0_11 = arith.constant 0 : index
      %c0_12 = arith.constant 0 : index
      %13 = vector.load %arg6[%c0_11, %c0_12] : memref<64x128xf32, #tpu.memory_space<vmem>>, vector<64x128xf32>
      tpu.vector_store %arg6[%c0_11, %c0_12], %12 {strides = array<i32>} : memref<64x128xf32, #tpu.memory_space<vmem>>, vector<64x128xf32>,
    } else {
    }
    %c0 = arith.constant 0 : index
    %c0_1 = arith.constant 0 : index
    %3 = vector.load %arg6[%c0, %c0_1] : memref<64x128xf32, #tpu.memory_space<vmem>>, vector<64x128xf32>
    %c0_2 = arith.constant 0 : index
    %c0_3 = arith.constant 0 : index
    %4 = vector.load %arg2[%c0_2, %c0_3] : memref<64x128xbf16, #tpu.memory_space<vmem>>, vector<64x128xbf16>
    %c0_4 = arith.constant 0 : index
    %c0_5 = arith.constant 0 : index
    %5 = vector.load %arg3[%c0_4, %c0_5] : memref<128x128xbf16, #tpu.memory_space<vmem>>, vector<128x128xbf16>
    %cst = arith.constant dense<0.000000e+00> : vector<64x128xf32>
    %6 = tpu.matmul %4, %5, %cst {dimension_numbers = #tpu.dot_dimension_numbers<[1], [0], [0], [1], [0, 0, 1, 1], [], []>} : vector<64x128xbf16>, vector<128x128xbf16>, vector<64x128xf32> -> vector<64x128xf32>
    %7 = arith.addf %3, %6 : vector<64x128xf32>
    %c0_6 = arith.constant 0 : index
    %c0_7 = arith.constant 0 : index
    %8 = vector.load %arg6[%c0_6, %c0_7] : memref<64x128xf32, #tpu.memory_space<vmem>>, vector<64x128xf32>
    tpu.vector_store %arg6[%c0_6, %c0_7], %7 {strides = array<i32>} : memref<64x128xf32, #tpu.memory_space<vmem>>, vector<64x128xf32>,
    %c0_i32_8 = arith.constant 0 : i32
    %9 = arith.cmpi eq, %arg1, %c0_i32_8 : i32
    %10 = arith.extui %9 : i1 to i32
    %c0_i32_9 = arith.constant 0 : i32
    %11 = arith.cmpi ne, %10, %c0_i32_9 : i32
    scf.if %11 {
      %c0_10 = arith.constant 0 : index
      %c0_11 = arith.constant 0 : index
      %12 = vector.load %arg6[%c0_10, %c0_11] : memref<64x128xf32, #tpu.memory_space<vmem>>, vector<64x128xf32>
      %13 = arith.truncf %12 : vector<64x128xf32> to vector<64x128xbf16>
      %c0_12 = arith.constant 0 : index
      %c0_13 = arith.constant 0 : index
      %14 = vector.load %arg4[%c0_12, %c0_13] : memref<128x128xbf16, #tpu.memory_space<vmem>>, vector<128x128xbf16>
      %cst_14 = arith.constant dense<0.000000e+00> : vector<64x128xf32>
      %15 = tpu.matmul %13, %14, %cst_14 {dimension_numbers = #tpu.dot_dimension_numbers<[1], [0], [0], [1], [0, 0, 1, 1], [], []>} : vector<64x128xbf16>, vector<128x128xbf16>, vector<64x128xf32> -> vector<64x128xf32>
      %16 = arith.truncf %15 : vector<64x128xf32> to vector<64x128xbf16>
      %c0_15 = arith.constant 0 : index
      %c0_16 = arith.constant 0 : index
      %17 = vector.load %arg5[%c0_15, %c0_16] : memref<64x128xbf16, #tpu.memory_space<vmem>>, vector<64x128xbf16>
      tpu.vector_store %arg5[%c0_15, %c0_16], %16 {strides = array<i32>} : memref<64x128xbf16, #tpu.memory_space<vmem>>, vector<64x128xbf16>,
    } else {
    }
    return
  }
  func.func @transform_0(%arg0: i32, %arg1: i32) -> (i32, i32) {
    %c0_i32 = arith.constant 0 : i32
    return %arg0, %arg1 : i32, i32
  }
  func.func @transform_1(%arg0: i32, %arg1: i32) -> (i32, i32) {
    %c0_i32 = arith.constant 0 : i32
    %c0_i32_0 = arith.constant 0 : i32
    return %arg1, %c0_i32 : i32, i32
  }
  func.func @transform_2(%arg0: i32, %arg1: i32) -> (i32, i32) {
    %c0_i32 = arith.constant 0 : i32
    %c0_i32_0 = arith.constant 0 : i32
    %c0_i32_1 = arith.constant 0 : i32
    return %c0_i32, %c0_i32_0 : i32, i32
  }
  func.func @transform_3(%arg0: i32, %arg1: i32) -> (i32, i32) {
    %c0_i32 = arith.constant 0 : i32
    %c0_i32_0 = arith.constant 0 : i32
    return %arg0, %c0_i32 : i32, i32
  }
}

module attributes {stable_mosaic.version = 11 : i64} {
  func.func @kernel(%arg0: i32, %arg1: i32, %arg2: memref<64x128xbf16, #tpu.memory_space<vmem>>, %arg3: memref<128x128xbf16, #tpu.memory_space<vmem>>, %arg4: memref<1x128xf32, #tpu.memory_space<vmem>>, %arg5: memref<64x128xf32, #tpu.memory_space<vmem>>) attributes {dimension_semantics = [#tpu.dimension_semantics<parallel>, #tpu.dimension_semantics<arbitrary>], iteration_bounds = array<i64: 2, 1>, scalar_prefetch = 0 : i64, scratch_operands = 0 : i64, tpu.core_type = #tpu.core_type<tc>, window_params = [{transform_indices = @transform_0, window_bounds = array<i64: 64, 128>}, {pipeline_mode = #tpu.pipeline_mode<synchronous>, transform_indices = @transform_1, window_bounds = array<i64: 128, 128>}, {pipeline_mode = #tpu.pipeline_mode<synchronous>, transform_indices = @transform_2, window_bounds = array<i64: 1, 128>}, {transform_indices = @transform_3, window_bounds = array<i64: 64, 128>}]} {
    %c128_i32 = arith.constant 128 : i32
    %0 = arith.muli %arg1, %c128_i32 : i32
    %1 = tpu.assume_multiple %0, 128 : i32
    %2 = arith.index_cast %1 : i32 to index
    %c0 = arith.constant 0 : index
    %3 = vector.load %arg3[%2, %c0] : memref<128x128xbf16, #tpu.memory_space<vmem>>, vector<128x128xbf16>
    %c0_0 = arith.constant 0 : index
    %c0_1 = arith.constant 0 : index
    %4 = vector.load %arg2[%c0_0, %c0_1] : memref<64x128xbf16, #tpu.memory_space<vmem>>, vector<64x128xbf16>
    %cst = arith.constant dense<0.000000e+00> : vector<64x128xf32>
    %5 = tpu.matmul %4, %3, %cst {dimension_numbers = #tpu.dot_dimension_numbers<[1], [0], [0], [1], [0, 0, 1, 1], [], []>} : vector<64x128xbf16>, vector<128x128xbf16>, vector<64x128xf32> -> vector<64x128xf32>
    %c0_i32 = arith.constant 0 : i32
    %6 = arith.cmpi eq, %arg1, %c0_i32 : i32
    %7 = arith.extui %6 : i1 to i32
    %c0_i32_2 = arith.constant 0 : i32
    %8 = arith.cmpi ne, %7, %c0_i32_2 : i32
    scf.if %8 {
      %c0_7 = arith.constant 0 : index
      %c0_8 = arith.constant 0 : index
      %15 = vector.load %arg5[%c0_7, %c0_8] : memref<64x128xf32, #tpu.memory_space<vmem>>, vector<64x128xf32>
      tpu.vector_store %arg5[%c0_7, %c0_8], %5 {strides = array<i32>} : memref<64x128xf32, #tpu.memory_space<vmem>>, vector<64x128xf32>,
    } else {
    }
    %c0_i32_3 = arith.constant 0 : i32
    %9 = arith.cmpi sgt, %arg1, %c0_i32_3 : i32
    %10 = arith.extui %9 : i1 to i32
    %c0_i32_4 = arith.constant 0 : i32
    %11 = arith.cmpi ne, %10, %c0_i32_4 : i32
    scf.if %11 {
      %c0_7 = arith.constant 0 : index
      %c0_8 = arith.constant 0 : index
      %15 = vector.load %arg5[%c0_7, %c0_8] : memref<64x128xf32, #tpu.memory_space<vmem>>, vector<64x128xf32>
      %16 = arith.addf %15, %5 : vector<64x128xf32>
      %c0_9 = arith.constant 0 : index
      %c0_10 = arith.constant 0 : index
      %17 = vector.load %arg5[%c0_9, %c0_10] : memref<64x128xf32, #tpu.memory_space<vmem>>, vector<64x128xf32>
      tpu.vector_store %arg5[%c0_9, %c0_10], %16 {strides = array<i32>} : memref<64x128xf32, #tpu.memory_space<vmem>>, vector<64x128xf32>,
    } else {
    }
    %c0_i32_5 = arith.constant 0 : i32
    %12 = arith.cmpi eq, %arg1, %c0_i32_5 : i32
    %13 = arith.extui %12 : i1 to i32
    %c0_i32_6 = arith.constant 0 : i32
    %14 = arith.cmpi ne, %13, %c0_i32_6 : i32
    scf.if %14 {
      %c0_7 = arith.constant 0 : index
      %c0_8 = arith.constant 0 : index
      %15 = vector.load %arg5[%c0_7, %c0_8] : memref<64x128xf32, #tpu.memory_space<vmem>>, vector<64x128xf32>
      %c0_9 = arith.constant 0 : index
      %c0_10 = arith.constant 0 : index
      %16 = vector.load %arg4[%c0_9, %c0_10] : memref<1x128xf32, #tpu.memory_space<vmem>>, vector<1x128xf32>
      %17 = vector.broadcast %16 : vector<1x128xf32> to vector<64x128xf32>
      %18 = arith.addf %15, %17 : vector<64x128xf32>
      %c0_11 = arith.constant 0 : index
      %c0_12 = arith.constant 0 : index
      %19 = vector.load %arg5[%c0_11, %c0_12] : memref<64x128xf32, #tpu.memory_space<vmem>>, vector<64x128xf32>
      tpu.vector_store %arg5[%c0_11, %c0_12], %18 {strides = array<i32>} : memref<64x128xf32, #tpu.memory_space<vmem>>, vector<64x128xf32>,
    } else {
    }
    return
  }
  func.func @transform_0(%arg0: i32, %arg1: i32) -> (i32, i32) {
    %c0_i32 = arith.constant 0 : i32
    return %arg0, %arg1 : i32, i32
  }
  func.func @transform_1(%arg0: i32, %arg1: i32) -> (i32, i32) {
    %c0_i32 = arith.constant 0 : i32
    %c0_i32_0 = arith.constant 0 : i32
    %c0_i32_1 = arith.constant 0 : i32
    return %c0_i32, %c0_i32_0 : i32, i32
  }
  func.func @transform_2(%arg0: i32, %arg1: i32) -> (i32, i32) {
    %c0_i32 = arith.constant 0 : i32
    %c0_i32_0 = arith.constant 0 : i32
    %c0_i32_1 = arith.constant 0 : i32
    return %c0_i32, %c0_i32_0 : i32, i32
  }
  func.func @transform_3(%arg0: i32, %arg1: i32) -> (i32, i32) {
    %c0_i32 = arith.constant 0 : i32
    %c0_i32_0 = arith.constant 0 : i32
    return %arg0, %c0_i32 : i32, i32
  }
}

</mosaic_0001>

<llo_original>
// kernel: gcn_compress_forward.3
$region0: #{gcn_compress_forward.3}
  #allocation0 [shape = 'u32[]', space=smem, size = 0x4, offset = 0x4, fixed_abs, tag = 'smem constant byte address 0x4 - core index']
  #allocation1 [shape = 'u32[144,128]{1,0:T(1,128)}', space=vmem, size = 0x12000, scoped, tag = 'internal scratch']
  %s0 = inlined_call_operand.vmem [shape: bf16[128,128], index: 0, kind: input, shape index: {}]
  %s1 = inlined_call_operand.vmem [shape: bf16[128,128], index: 1, kind: input, shape index: {}]
  %s2 = inlined_call_operand.vmem [shape: f32[1,128], index: 2, kind: input, shape index: {}]
  %s3 = inlined_call_operand.vmem [shape: f32[128,128], index: 3, kind: output, shape index: {}]
  %s4 = sld [smem:[#allocation0]]
  $region57: #{gcn_compress_forward.3} parent=0
    _
  %s6 = ssub.s32 1, %s4
  %s7 = scalar_select 0, %s6, %s4
  loop: start=0, step=1, limit=4
  $region2: #{gcn_compress_forward.3} parent=0 // loop_pre_header
    _
  $region3: #{gcn_compress_forward.3} parent=0 // loop_header
    %s9 = sphi 0, %s13
    %p10 = scmp.ge.s32.totalorder %s9, 4
    %s16 = sphi 0, %s28
    %s17 = sphi 0, %s24
    %s18 = sphi 0, %s16
    %s19 = sphi 0, %s17
    %s20 = sphi 0, %s18
    %s21 = sphi 0, %s19
    %s33 = sphi 0, %s35
    %s36 = sphi 0, %s33
    %s37 = sphi 0, %s36
    %s53 = sphi 0, %s37
    %s57 = sphi 0, %s57
    %s59 = sphi 0, %s57
    %s60 = sphi 0, %s59
    %s74 = sphi 0, %s60
    %s78 = sphi 0, %s78
    %s80 = sphi 0, %s78
    %s81 = sphi 0, %s80
    %s95 = sphi 0, %s81
    %s101 = sphi 0, %s103
    %s104 = sphi 0, %s101
    %s105 = sphi 0, %s104
    %s121 = sphi 0, %s105
  $region4: #{gcn_compress_forward.3} parent=0 // loop_header_branch
    %12 = sbr.rel (%p10) target = $region8
  $region5: #{gcn_compress_forward.3} parent=0 // loop_body
    %s14 = ssub.s32 %s9, 1
    %s15 = ssub.s32 %s9, 2
    %s22 = sadd.s32 1, %s17
    %p23 = scmp.ge.s32.totalorder %s22, 1
    %s24 = scalar_select %p23, 0, %s22
    %s25 = sadd.s32 1, %s16
    %s26 = scalar_select %p23, %s25, %s16
    %p27 = scmp.ge.s32.totalorder %s26, 2
    %s28 = scalar_select %p27, 0, %s26
    %s29 = ssub.s32 %s16, %s28
    %s30 = ssub.s32 %s17, %s24
    %s31 = sor.u32 %s29, %s30
    %p32 = scmp.eq.s32.totalorder %s31, 0
    %s34 = sadd.s32 %s33, 1
    %s35 = scalar_select %p32, %s33, %s34
    %p38 = pneg %p32
    %p39 = scmp.eq.s32.totalorder %s9, 1
    %p40 = por %p38, %p39
    %p41 = scmp.ne.s32.totalorder %s33, %s36
    %p42 = scmp.eq.s32.totalorder %s9, 0
    %p43 = por %p41, %p42
    %p44 = scmp.ne.s32.totalorder %s33, %s36
    %p45 = scmp.eq.s32.totalorder %s14, 1
    %p46 = por %p44, %p45
    %p47 = scmp.ne.s32.totalorder %s36, %s37
    %p48 = scmp.eq.s32.totalorder %s14, 0
    %p49 = por %p47, %p48
    %p50 = scmp.ne.s32.totalorder %s36, %s37
    %p51 = scmp.eq.s32.totalorder %s15, 1
    %p52 = por %p50, %p51
    %p54 = scmp.ne.s32.totalorder %s37, %s53
    %p55 = scmp.eq.s32.totalorder %s15, 0
    %p56 = por %p54, %p55
    %s58 = sadd.s32 %s57, 1
    %p61 = scmp.eq.s32.totalorder %s9, 1
    %p62 = scmp.ne.s32.totalorder %s57, %s59
    %p63 = scmp.eq.s32.totalorder %s9, 0
    %p64 = por %p62, %p63
    %p65 = scmp.ne.s32.totalorder %s57, %s59
    %p66 = scmp.eq.s32.totalorder %s14, 1
    %p67 = por %p65, %p66
    %p68 = scmp.ne.s32.totalorder %s59, %s60
    %p69 = scmp.eq.s32.totalorder %s14, 0
    %p70 = por %p68, %p69
    %p71 = scmp.ne.s32.totalorder %s59, %s60
    %p72 = scmp.eq.s32.totalorder %s15, 1
    %p73 = por %p71, %p72
    %p75 = scmp.ne.s32.totalorder %s60, %s74
    %p76 = scmp.eq.s32.totalorder %s15, 0
    %p77 = por %p75, %p76
    %s79 = sadd.s32 %s78, 1
    %p82 = scmp.eq.s32.totalorder %s9, 1
    %p83 = scmp.ne.s32.totalorder %s78, %s80
    %p84 = scmp.eq.s32.totalorder %s9, 0
    %p85 = por %p83, %p84
    %p86 = scmp.ne.s32.totalorder %s78, %s80
    %p87 = scmp.eq.s32.totalorder %s14, 1
    %p88 = por %p86, %p87
    %p89 = scmp.ne.s32.totalorder %s80, %s81
    %p90 = scmp.eq.s32.totalorder %s14, 0
    %p91 = por %p89, %p90
    %p92 = scmp.ne.s32.totalorder %s80, %s81
    %p93 = scmp.eq.s32.totalorder %s15, 1
    %p94 = por %p92, %p93
    %p96 = scmp.ne.s32.totalorder %s81, %s95
    %p97 = scmp.eq.s32.totalorder %s15, 0
    %p98 = por %p96, %p97
    %s99 = ssub.s32 %s16, %s28
    %p100 = scmp.eq.s32.totalorder %s99, 0
    %s102 = sadd.s32 %s101, 1
    %s103 = scalar_select %p100, %s101, %s102
    %p106 = pneg %p100
    %p107 = scmp.eq.s32.totalorder %s9, 1
    %p108 = por %p106, %p107
    %p109 = scmp.ne.s32.totalorder %s101, %s104
    %p110 = scmp.eq.s32.totalorder %s9, 0
    %p111 = por %p109, %p110
    %p112 = scmp.ne.s32.totalorder %s101, %s104
    %p113 = scmp.eq.s32.totalorder %s14, 1
    %p114 = por %p112, %p113
    %p115 = scmp.ne.s32.totalorder %s104, %s105
    %p116 = scmp.eq.s32.totalorder %s14, 0
    %p117 = por %p115, %p116
    %p118 = scmp.ne.s32.totalorder %s104, %s105
    %p119 = scmp.eq.s32.totalorder %s15, 1
    %p120 = por %p118, %p119
    %p122 = scmp.ne.s32.totalorder %s105, %s121
    %p123 = scmp.eq.s32.totalorder %s15, 0
    %p124 = por %p122, %p123
    %p125 = scmp.le.s32.totalorder 1, %s9
    %p126 = scmp.lt.s32.totalorder %s9, 3
    %p127 = pnand %p125, %p126
    %p128 = pneg %p127
    // Predicated region
    $region9: #{gcn_compress_forward.3} parent=5 // pred_check
      _
    $region10: #{gcn_compress_forward.3} parent=5 // pred_check_branch
      %130 = sbr.rel (%p127) target = $region12
    $region11: #{gcn_compress_forward.3} parent=5 // pred_region
      %s131 = ssub.s32 %s9, 1
      // Predicated region
      $region13: #{gcn_compress_forward.3} parent=11 // pred_check
        %p132 = pneg %p70
      $region14: #{gcn_compress_forward.3} parent=11 // pred_check_branch
        %134 = sbr.rel (%p132) target = $region16
      $region15: #{gcn_compress_forward.3} parent=11 // pred_region
        _
      $region16: #{gcn_compress_forward.3} parent=11 // pred_fallthru
        _
      // Predicated region
      $region17: #{gcn_compress_forward.3} parent=11 // pred_check
        %p135 = pneg %p91
      $region18: #{gcn_compress_forward.3} parent=11 // pred_check_branch
        %137 = sbr.rel (%p135) target = $region20
      $region19: #{gcn_compress_forward.3} parent=11 // pred_region
        _
      $region20: #{gcn_compress_forward.3} parent=11 // pred_fallthru
        _
    $region12: #{gcn_compress_forward.3} parent=5 // pred_fallthru
      _
    %p138 = scmp.lt.s32.totalorder %s9, 2
    // Predicated region
    $region21: #{gcn_compress_forward.3} parent=5 // pred_check
      %p139 = pneg %p138
    $region22: #{gcn_compress_forward.3} parent=5 // pred_check_branch
      %141 = sbr.rel (%p139) target = $region24
    $region23: #{gcn_compress_forward.3} parent=5 // pred_region
      // Predicated region
      $region25: #{gcn_compress_forward.3} parent=23 // pred_check
        %p142 = pneg %p43
      $region26: #{gcn_compress_forward.3} parent=23 // pred_check_branch
        %144 = sbr.rel (%p142) target = $region28
      $region27: #{gcn_compress_forward.3} parent=23 // pred_region
        %s145 = smul.u32 8, %s16
        %p146 = scmp.lt.s32.totalorder %s145, 15
        %s147 = scalar_select %p146, %s145, 15
        %p148 = scmp.lt.s32.totalorder %s17, 0
        %s149 = scalar_select %p148, %s17, 0
        %s150 = sadd.s32 %s149, %s147
        %s151 = smul.addr %s150, 4
        %s152 = scalar_lea.vmem %s0, %s151
        %s153 = smul.u32 8, %s16
      $region28: #{gcn_compress_forward.3} parent=23 // pred_fallthru
        _
    $region24: #{gcn_compress_forward.3} parent=5 // pred_fallthru
      _
    %p154 = scmp.le.s32.totalorder 1, %s9
    %p155 = scmp.lt.s32.totalorder %s9, 3
    %p156 = pnand %p154, %p155
    %p157 = pneg %p156
    // Predicated region
    $region29: #{gcn_compress_forward.3} parent=5 // pred_check
      _
    $region30: #{gcn_compress_forward.3} parent=5 // pred_check_branch
      %159 = sbr.rel (%p156) target = $region32
    $region31: #{gcn_compress_forward.3} parent=5 // pred_region
      %s160 = ssub.s32 %s9, 1
      %s161 = smul.u32 8, %s18
      %p162 = scmp.lt.s32.totalorder %s161, 15
      %s163 = scalar_select %p162, %s161, 15
      %p164 = scmp.lt.s32.totalorder %s19, 0
      %s165 = scalar_select %p164, %s19, 0
      %s166 = sadd.s32 %s165, %s163
      %s167 = smul.addr %s166, 4
      %s168 = scalar_lea.vmem %s0, %s167
      %p169 = pneg %p49
      %p170 = pneg %p46
      %p171 = pneg %p70
      %p172 = pneg %p67
      %p173 = pneg %p91
      %p174 = pneg %p88
      %p175 = pneg %p117
      %p176 = pneg %p114
      %s177 = smul.u32 8, %s18
      %p178 = scmp.lt.s32.totalorder %s177, 15
      %s179 = scalar_select %p178, %s177, 15
      %s180 = smul.addr %s179, 8
      %s181 = scalar_lea.vmem %s3, %s180
      %s182 = smul.u32 8, %s18
      %p183 = scmp.lt.s32.totalorder %s182, 15
      %s184 = scalar_select %p183, %s182, 15
      %p185 = scmp.lt.s32.totalorder %s19, 0
      %s186 = scalar_select %p185, %s19, 0
      %s187 = sadd.s32 %s186, %s184
      %s188 = smul.addr %s187, 4
      %s189 = scalar_lea.vmem %s0, %s188
      %s190 = smul.u32 8, %s18
      %s191 = smul.u32 8, %s18
      %p192 = scmp.lt.s32.totalorder %s191, 15
      %s193 = scalar_select %p192, %s191, 15
      %s194 = smul.addr %s193, 8
      %s195 = scalar_lea.vmem %s3, %s194
      %s196 = smul.u32 8, %s18
      %s198 = smul.u32 %s19, 128
      %s199 = sshra.s32 %s198, 3
      %s200 = sand.u32 %s198, 7
      %s201 = smul.addr %s199, 4
      %s202 = scalar_lea.vmem %s1, %s201
      %v203 = vld [vmem:[%s202] sm:$0xf]
      %v204 = vld [vmem:[%s202 + $0x4] sm:$0xf]
      %v205 = vld [vmem:[%s202 + $0x8] sm:$0xf]
      %v206 = vld [vmem:[%s202 + $0xc] sm:$0xf]
      %v207 = vld [vmem:[%s202 + $0x10] sm:$0xf]
      %v208 = vld [vmem:[%s202 + $0x14] sm:$0xf]
      %v209 = vld [vmem:[%s202 + $0x18] sm:$0xf]
      %v210 = vld [vmem:[%s202 + $0x1c] sm:$0xf]
      %v211 = vld [vmem:[%s202 + $0x20] sm:$0xf]
      %v212 = vld [vmem:[%s202 + $0x24] sm:$0xf]
      %v213 = vld [vmem:[%s202 + $0x28] sm:$0xf]
      %v214 = vld [vmem:[%s202 + $0x2c] sm:$0xf]
      %v215 = vld [vmem:[%s202 + $0x30] sm:$0xf]
      %v216 = vld [vmem:[%s202 + $0x34] sm:$0xf]
      %v217 = vld [vmem:[%s202 + $0x38] sm:$0xf]
      %v218 = vld [vmem:[%s202 + $0x3c] sm:$0xf]
      %v219 = vld [vmem:[%s189] sm:$0xf]
      %v220 = vld [vmem:[%s189 + $0x4] sm:$0xf]
      %v221 = vld [vmem:[%s189 + $0x8] sm:$0xf]
      %v222 = vld [vmem:[%s189 + $0xc] sm:$0xf]
      %v223 = vld [vmem:[%s189 + $0x10] sm:$0xf]
      %v224 = vld [vmem:[%s189 + $0x14] sm:$0xf]
      %v225 = vld [vmem:[%s189 + $0x18] sm:$0xf]
      %v226 = vld [vmem:[%s189 + $0x1c] sm:$0xf]
      %v235 = vunpack.c.l.b16 %v219
      %v236 = vunpack.c.l.b16 %v220
      %v237 = vunpack.c.l.b16 %v221
      %v238 = vunpack.c.l.b16 %v222
      %v239 = vunpack.c.l.b16 %v223
      %v240 = vunpack.c.l.b16 %v224
      %v241 = vunpack.c.l.b16 %v225
      %v242 = vunpack.c.l.b16 %v226
      %v243 = vpack.c.b16 %v236, %v235
      %v244 = vpack.c.b16 %v238, %v237
      %v245 = vpack.c.b16 %v240, %v239
      %v246 = vpack.c.b16 %v242, %v241
      %v267 = vunpack.c.l.b16 %v203
      %v268 = vunpack.c.l.b16 %v204
      %v269 = vunpack.c.l.b16 %v205
      %v270 = vunpack.c.l.b16 %v206
      %v271 = vunpack.c.l.b16 %v207
      %v272 = vunpack.c.l.b16 %v208
      %v273 = vunpack.c.l.b16 %v209
      %v274 = vunpack.c.l.b16 %v210
      %v275 = vunpack.c.l.b16 %v211
      %v276 = vunpack.c.l.b16 %v212
      %v277 = vunpack.c.l.b16 %v213
      %v278 = vunpack.c.l.b16 %v214
      %v279 = vunpack.c.l.b16 %v215
      %v280 = vunpack.c.l.b16 %v216
      %v281 = vunpack.c.l.b16 %v217
      %v282 = vunpack.c.l.b16 %v218
      %v283 = vpack.c.b16 %v268, %v267
      %v284 = vpack.c.b16 %v270, %v269
      %v285 = vpack.c.b16 %v272, %v271
      %v286 = vpack.c.b16 %v274, %v273
      %v287 = vpack.c.b16 %v276, %v275
      %v288 = vpack.c.b16 %v278, %v277
      %v289 = vpack.c.b16 %v280, %v279
      %v290 = vpack.c.b16 %v282, %v281
      %299 = vmatprep.subr.bf16.mxu0 0
      %300 = vmatpush1.bf16.msra.mxu0 %v290
      %301 = vmatprep.subr.bf16.mxu0 0
      %302 = vmatpush1.bf16.msra.mxu0 %v289
      %303 = vmatprep.subr.bf16.mxu0 0
      %304 = vmatpush1.bf16.msra.mxu0 %v288
      %305 = vmatprep.subr.bf16.mxu0 0
      %306 = vmatpush1.bf16.msra.mxu0 %v287
      %307 = vmatprep.subr.bf16.mxu0 0
      %308 = vmatpush1.bf16.msra.mxu0 %v286
      %309 = vmatprep.subr.bf16.mxu0 0
      %310 = vmatpush1.bf16.msra.mxu0 %v285
      %311 = vmatprep.subr.bf16.mxu0 0
      %312 = vmatpush1.bf16.msra.mxu0 %v284
      %313 = vmatprep.subr.bf16.mxu0 0
      %314 = vmatpush1.bf16.msra.mxu0 %v283
      %315 = vmatprep.subr.bf16.mxu0 0
      %316 = vmatpush2.bf16.msra.mxu0 0
      %317 = vmatprep.subr.bf16.mxu0 0
      %318 = vmatpush2.bf16.msra.mxu0 0
      %319 = vmatprep.subr.bf16.mxu0 0
      %320 = vmatpush2.bf16.msra.mxu0 0
      %321 = vmatprep.subr.bf16.mxu0 0
      %322 = vmatpush2.bf16.msra.mxu0 0
      %323 = vmatprep.subr.bf16.mxu0 0
      %324 = vmatpush2.bf16.msra.mxu0 0
      %325 = vmatprep.subr.bf16.mxu0 0
      %326 = vmatpush2.bf16.msra.mxu0 0
      %327 = vmatprep.subr.bf16.mxu0 0
      %328 = vmatpush2.bf16.msra.mxu0 0
      %329 = vmatprep.subr.bf16.mxu0 0
      %330 = vmatpush2.bf16.msra.mxu0 0
      %331 = vmatprep.mubr.bf16.mxu0 0
      %332 = vmatmul.mubr.bf16.gmra.mxu0 %v243
      %v333 = vpop.f32.mrf.mxu0
      %v334 = vadd.f32 0.0, %v333
      %v335 = vpop.f32.mrf.mxu0
      %v336 = vpop.f32.mrf.mxu0
      %v337 = vadd.f32 0.0, %v336
      %v338 = vpop.f32.mrf.mxu0
      %339 = vmatprep.mubr.bf16.mxu0 0
      %340 = vmatmul.mubr.bf16.gmra.mxu0 %v244
      %v341 = vpop.f32.mrf.mxu0
      %v342 = vadd.f32 0.0, %v341
      %v343 = vpop.f32.mrf.mxu0
      %v344 = vpop.f32.mrf.mxu0
      %v345 = vadd.f32 0.0, %v344
      %v346 = vpop.f32.mrf.mxu0
      %347 = vmatprep.mubr.bf16.mxu0 0
      %348 = vmatmul.mubr.bf16.gmra.mxu0 %v245
      %v349 = vpop.f32.mrf.mxu0
      %v350 = vadd.f32 0.0, %v349
      %v351 = vpop.f32.mrf.mxu0
      %v352 = vpop.f32.mrf.mxu0
      %v353 = vadd.f32 0.0, %v352
      %v354 = vpop.f32.mrf.mxu0
      %355 = vmatprep.mubr.bf16.mxu0 0
      %356 = vmatmul.mubr.bf16.gmra.mxu0 %v246
      %v357 = vpop.f32.mrf.mxu0
      %v358 = vadd.f32 0.0, %v357
      %v359 = vpop.f32.mrf.mxu0
      %v360 = vpop.f32.mrf.mxu0
      %v361 = vadd.f32 0.0, %v360
      %v362 = vpop.f32.mrf.mxu0
      %363 = vdwg.mxu0
      %p364 = scmp.eq.s32.totalorder %s19, 0
      // Predicated region
      $region33: #{gcn_compress_forward.3} parent=31 // pred_check
        %p365 = pneg %p364
      $region34: #{gcn_compress_forward.3} parent=31 // pred_check_branch
        %367 = sbr.rel (%p365) target = $region36
      $region35: #{gcn_compress_forward.3} parent=31 // pred_region
        %368 = vst [vmem:[%s195] sm:$0xff] %v334
        %369 = vst [vmem:[%s195 + $0x8] sm:$0xff] %v337
        %370 = vst [vmem:[%s195 + $0x10] sm:$0xff] %v342
        %371 = vst [vmem:[%s195 + $0x18] sm:$0xff] %v345
        %372 = vst [vmem:[%s195 + $0x20] sm:$0xff] %v350
        %373 = vst [vmem:[%s195 + $0x28] sm:$0xff] %v353
        %374 = vst [vmem:[%s195 + $0x30] sm:$0xff] %v358
        %375 = vst [vmem:[%s195 + $0x38] sm:$0xff] %v361
      $region36: #{gcn_compress_forward.3} parent=31 // pred_fallthru
        _
      %p376 = scmp.gt.s32.totalorder %s19, 0
      // Predicated region
      $region37: #{gcn_compress_forward.3} parent=31 // pred_check
        %p377 = pneg %p376
      $region38: #{gcn_compress_forward.3} parent=31 // pred_check_branch
        %379 = sbr.rel (%p377) target = $region40
      $region39: #{gcn_compress_forward.3} parent=31 // pred_region
        %v380 = vld [vmem:[%s195] sm:$0xff]
        %v381 = vld [vmem:[%s195 + $0x8] sm:$0xff]
        %v382 = vld [vmem:[%s195 + $0x10] sm:$0xff]
        %v383 = vld [vmem:[%s195 + $0x18] sm:$0xff]
        %v384 = vld [vmem:[%s195 + $0x20] sm:$0xff]
        %v385 = vld [vmem:[%s195 + $0x28] sm:$0xff]
        %v386 = vld [vmem:[%s195 + $0x30] sm:$0xff]
        %v387 = vld [vmem:[%s195 + $0x38] sm:$0xff]
        %v388 = vadd.f32 %v380, %v334
        %v389 = vadd.f32 %v381, %v337
        %v390 = vadd.f32 %v382, %v342
        %v391 = vadd.f32 %v383, %v345
        %v392 = vadd.f32 %v384, %v350
        %v393 = vadd.f32 %v385, %v353
        %v394 = vadd.f32 %v386, %v358
        %v395 = vadd.f32 %v387, %v361
        %396 = vst [vmem:[%s195] sm:$0xff] %v388
        %397 = vst [vmem:[%s195 + $0x8] sm:$0xff] %v389
        %398 = vst [vmem:[%s195 + $0x10] sm:$0xff] %v390
        %399 = vst [vmem:[%s195 + $0x18] sm:$0xff] %v391
        %400 = vst [vmem:[%s195 + $0x20] sm:$0xff] %v392
        %401 = vst [vmem:[%s195 + $0x28] sm:$0xff] %v393
        %402 = vst [vmem:[%s195 + $0x30] sm:$0xff] %v394
        %403 = vst [vmem:[%s195 + $0x38] sm:$0xff] %v395
      $region40: #{gcn_compress_forward.3} parent=31 // pred_fallthru
        _
      // Predicated region
      $region41: #{gcn_compress_forward.3} parent=31 // pred_check
        %p404 = pneg %p364
      $region42: #{gcn_compress_forward.3} parent=31 // pred_check_branch
        %406 = sbr.rel (%p404) target = $region44
      $region43: #{gcn_compress_forward.3} parent=31 // pred_region
        %v407 = vld [vmem:[%s195] sm:$0xff]
        %v408 = vld [vmem:[%s195 + $0x8] sm:$0xff]
        %v409 = vld [vmem:[%s195 + $0x10] sm:$0xff]
        %v410 = vld [vmem:[%s195 + $0x18] sm:$0xff]
        %v411 = vld [vmem:[%s195 + $0x20] sm:$0xff]
        %v412 = vld [vmem:[%s195 + $0x28] sm:$0xff]
        %v413 = vld [vmem:[%s195 + $0x30] sm:$0xff]
        %v414 = vld [vmem:[%s195 + $0x38] sm:$0xff]
        %v415 = vld [vmem:[%s2] sm:$0x1]
        %v417 = vlaneseq
        %v418 = vshrl.u32 %v417, 7
        %v419 = vsub.s32 0, %v418
        %v420 = vrot.slane %v415, %v419
        %v422 = vadd.f32 %v407, %v420
        %v423 = vadd.f32 %v408, %v420
        %v424 = vadd.f32 %v409, %v420
        %v425 = vadd.f32 %v410, %v420
        %v426 = vadd.f32 %v411, %v420
        %v427 = vadd.f32 %v412, %v420
        %v428 = vadd.f32 %v413, %v420
        %v429 = vadd.f32 %v414, %v420
        %430 = vst [vmem:[%s195] sm:$0xff] %v422
        %431 = vst [vmem:[%s195 + $0x8] sm:$0xff] %v423
        %432 = vst [vmem:[%s195 + $0x10] sm:$0xff] %v424
        %433 = vst [vmem:[%s195 + $0x18] sm:$0xff] %v425
        %434 = vst [vmem:[%s195 + $0x20] sm:$0xff] %v426
        %435 = vst [vmem:[%s195 + $0x28] sm:$0xff] %v427
        %436 = vst [vmem:[%s195 + $0x30] sm:$0xff] %v428
        %437 = vst [vmem:[%s195 + $0x38] sm:$0xff] %v429
      $region44: #{gcn_compress_forward.3} parent=31 // pred_fallthru
        _
      %s438 = smul.u32 8, %s18
      %p439 = scmp.lt.s32.totalorder %s438, 15
      %s440 = scalar_select %p439, %s438, 15
      %s441 = smul.addr %s440, 8
      %s442 = scalar_lea.vmem %s3, %s441
      // Predicated region
      $region45: #{gcn_compress_forward.3} parent=31 // pred_check
        %p443 = pneg %p114
      $region46: #{gcn_compress_forward.3} parent=31 // pred_check_branch
        %445 = sbr.rel (%p443) target = $region48
      $region47: #{gcn_compress_forward.3} parent=31 // pred_region
        %s446 = smul.u32 8, %s18
      $region48: #{gcn_compress_forward.3} parent=31 // pred_fallthru
        _
    $region32: #{gcn_compress_forward.3} parent=5 // pred_fallthru
      _
    %p447 = scmp.le.s32.totalorder 2, %s9
    // Predicated region
    $region49: #{gcn_compress_forward.3} parent=5 // pred_check
      %p448 = pneg %p447
    $region50: #{gcn_compress_forward.3} parent=5 // pred_check_branch
      %450 = sbr.rel (%p448) target = $region52
    $region51: #{gcn_compress_forward.3} parent=5 // pred_region
      %s451 = ssub.s32 %s9, 2
      // Predicated region
      $region53: #{gcn_compress_forward.3} parent=51 // pred_check
        %p452 = pneg %p120
      $region54: #{gcn_compress_forward.3} parent=51 // pred_check_branch
        %454 = sbr.rel (%p452) target = $region56
      $region55: #{gcn_compress_forward.3} parent=51 // pred_region
        %s455 = smul.u32 8, %s20
        %p456 = scmp.lt.s32.totalorder %s455, 15
        %s457 = scalar_select %p456, %s455, 15
        %s458 = smul.addr %s457, 8
        %s459 = scalar_lea.vmem %s3, %s458
      $region56: #{gcn_compress_forward.3} parent=51 // pred_fallthru
        _
    $region52: #{gcn_compress_forward.3} parent=5 // pred_fallthru
      _
  $region6: #{gcn_compress_forward.3} parent=0 // loop_footer
    %s13 = sadd.s32 1, %s9
  $region7: #{gcn_compress_forward.3} parent=0 // loop_footer_branch
    %8 = sbr.rel target = $region3
  $region8: #{gcn_compress_forward.3} parent=0 // loop_exit
    _

// kernel: gcn_compress_forward.2
$region0: #{gcn_compress_forward.2}
  #allocation0 [shape = 'u32[]', space=smem, size = 0x4, offset = 0x4, fixed_abs, tag = 'smem constant byte address 0x4 - core index']
  #allocation1 [shape = 'u32[144,128]{1,0:T(1,128)}', space=vmem, size = 0x12000, scoped, tag = 'internal scratch']
  #allocation2 [shape = 'f32[64,128]{1,0:T(8,128)}', space=vmem, size = 0x8000, scoped, tag = 'scratch operand']
  %s0 = inlined_call_operand.vmem [shape: bf16[128,128], index: 0, kind: input, shape index: {}]
  %s1 = inlined_call_operand.vmem [shape: bf16[128,128], index: 1, kind: input, shape index: {}]
  %s2 = inlined_call_operand.vmem [shape: bf16[128,128], index: 2, kind: input, shape index: {}]
  %s3 = inlined_call_operand.vmem [shape: bf16[128,128], index: 3, kind: output, shape index: {}]
  %s4 = sld [smem:[#allocation0]]
  $region53: #{gcn_compress_forward.2} parent=0
    _
  %s6 = ssub.s32 1, %s4
  %s7 = scalar_select 0, %s6, %s4
  loop: start=0, step=1, limit=4
  $region2: #{gcn_compress_forward.2} parent=0 // loop_pre_header
    _
  $region3: #{gcn_compress_forward.2} parent=0 // loop_header
    %s9 = sphi 0, %s13
    %p10 = scmp.ge.s32.totalorder %s9, 4
    %s16 = sphi 0, %s28
    %s17 = sphi 0, %s24
    %s18 = sphi 0, %s16
    %s19 = sphi 0, %s17
    %s20 = sphi 0, %s18
    %s21 = sphi 0, %s19
    %s33 = sphi 0, %s35
    %s36 = sphi 0, %s33
    %s37 = sphi 0, %s36
    %s53 = sphi 0, %s37
    %s59 = sphi 0, %s61
    %s62 = sphi 0, %s59
    %s63 = sphi 0, %s62
    %s79 = sphi 0, %s63
    %s83 = sphi 0, %s83
    %s85 = sphi 0, %s83
    %s86 = sphi 0, %s85
    %s100 = sphi 0, %s86
    %s106 = sphi 0, %s108
    %s109 = sphi 0, %s106
    %s110 = sphi 0, %s109
    %s126 = sphi 0, %s110
  $region4: #{gcn_compress_forward.2} parent=0 // loop_header_branch
    %12 = sbr.rel (%p10) target = $region8
  $region5: #{gcn_compress_forward.2} parent=0 // loop_body
    %s14 = ssub.s32 %s9, 1
    %s15 = ssub.s32 %s9, 2
    %s22 = sadd.s32 1, %s17
    %p23 = scmp.ge.s32.totalorder %s22, 1
    %s24 = scalar_select %p23, 0, %s22
    %s25 = sadd.s32 1, %s16
    %s26 = scalar_select %p23, %s25, %s16
    %p27 = scmp.ge.s32.totalorder %s26, 2
    %s28 = scalar_select %p27, 0, %s26
    %s29 = ssub.s32 %s16, %s28
    %s30 = ssub.s32 %s17, %s24
    %s31 = sor.u32 %s29, %s30
    %p32 = scmp.eq.s32.totalorder %s31, 0
    %s34 = sadd.s32 %s33, 1
    %s35 = scalar_select %p32, %s33, %s34
    %p38 = pneg %p32
    %p39 = scmp.eq.s32.totalorder %s9, 1
    %p40 = por %p38, %p39
    %p41 = scmp.ne.s32.totalorder %s33, %s36
    %p42 = scmp.eq.s32.totalorder %s9, 0
    %p43 = por %p41, %p42
    %p44 = scmp.ne.s32.totalorder %s33, %s36
    %p45 = scmp.eq.s32.totalorder %s14, 1
    %p46 = por %p44, %p45
    %p47 = scmp.ne.s32.totalorder %s36, %s37
    %p48 = scmp.eq.s32.totalorder %s14, 0
    %p49 = por %p47, %p48
    %p50 = scmp.ne.s32.totalorder %s36, %s37
    %p51 = scmp.eq.s32.totalorder %s15, 1
    %p52 = por %p50, %p51
    %p54 = scmp.ne.s32.totalorder %s37, %s53
    %p55 = scmp.eq.s32.totalorder %s15, 0
    %p56 = por %p54, %p55
    %s57 = ssub.s32 %s17, %s24
    %p58 = scmp.eq.s32.totalorder %s57, 0
    %s60 = sadd.s32 %s59, 1
    %s61 = scalar_select %p58, %s59, %s60
    %p64 = pneg %p58
    %p65 = scmp.eq.s32.totalorder %s9, 1
    %p66 = por %p64, %p65
    %p67 = scmp.ne.s32.totalorder %s59, %s62
    %p68 = scmp.eq.s32.totalorder %s9, 0
    %p69 = por %p67, %p68
    %p70 = scmp.ne.s32.totalorder %s59, %s62
    %p71 = scmp.eq.s32.totalorder %s14, 1
    %p72 = por %p70, %p71
    %p73 = scmp.ne.s32.totalorder %s62, %s63
    %p74 = scmp.eq.s32.totalorder %s14, 0
    %p75 = por %p73, %p74
    %p76 = scmp.ne.s32.totalorder %s62, %s63
    %p77 = scmp.eq.s32.totalorder %s15, 1
    %p78 = por %p76, %p77
    %p80 = scmp.ne.s32.totalorder %s63, %s79
    %p81 = scmp.eq.s32.totalorder %s15, 0
    %p82 = por %p80, %p81
    %s84 = sadd.s32 %s83, 1
    %p87 = scmp.eq.s32.totalorder %s9, 1
    %p88 = scmp.ne.s32.totalorder %s83, %s85
    %p89 = scmp.eq.s32.totalorder %s9, 0
    %p90 = por %p88, %p89
    %p91 = scmp.ne.s32.totalorder %s83, %s85
    %p92 = scmp.eq.s32.totalorder %s14, 1
    %p93 = por %p91, %p92
    %p94 = scmp.ne.s32.totalorder %s85, %s86
    %p95 = scmp.eq.s32.totalorder %s14, 0
    %p96 = por %p94, %p95
    %p97 = scmp.ne.s32.totalorder %s85, %s86
    %p98 = scmp.eq.s32.totalorder %s15, 1
    %p99 = por %p97, %p98
    %p101 = scmp.ne.s32.totalorder %s86, %s100
    %p102 = scmp.eq.s32.totalorder %s15, 0
    %p103 = por %p101, %p102
    %s104 = ssub.s32 %s16, %s28
    %p105 = scmp.eq.s32.totalorder %s104, 0
    %s107 = sadd.s32 %s106, 1
    %s108 = scalar_select %p105, %s106, %s107
    %p111 = pneg %p105
    %p112 = scmp.eq.s32.totalorder %s9, 1
    %p113 = por %p111, %p112
    %p114 = scmp.ne.s32.totalorder %s106, %s109
    %p115 = scmp.eq.s32.totalorder %s9, 0
    %p116 = por %p114, %p115
    %p117 = scmp.ne.s32.totalorder %s106, %s109
    %p118 = scmp.eq.s32.totalorder %s14, 1
    %p119 = por %p117, %p118
    %p120 = scmp.ne.s32.totalorder %s109, %s110
    %p121 = scmp.eq.s32.totalorder %s14, 0
    %p122 = por %p120, %p121
    %p123 = scmp.ne.s32.totalorder %s109, %s110
    %p124 = scmp.eq.s32.totalorder %s15, 1
    %p125 = por %p123, %p124
    %p127 = scmp.ne.s32.totalorder %s110, %s126
    %p128 = scmp.eq.s32.totalorder %s15, 0
    %p129 = por %p127, %p128
    %p130 = scmp.le.s32.totalorder 1, %s9
    %p131 = scmp.lt.s32.totalorder %s9, 3
    %p132 = pnand %p130, %p131
    %p133 = pneg %p132
    // Predicated region
    $region9: #{gcn_compress_forward.2} parent=5 // pred_check
      _
    $region10: #{gcn_compress_forward.2} parent=5 // pred_check_branch
      %135 = sbr.rel (%p132) target = $region12
    $region11: #{gcn_compress_forward.2} parent=5 // pred_region
      %s136 = ssub.s32 %s9, 1
      // Predicated region
      $region13: #{gcn_compress_forward.2} parent=11 // pred_check
        %p137 = pneg %p75
      $region14: #{gcn_compress_forward.2} parent=11 // pred_check_branch
        %139 = sbr.rel (%p137) target = $region16
      $region15: #{gcn_compress_forward.2} parent=11 // pred_region
        %s140 = smul.u32 16, %s19
        %p141 = scmp.lt.s32.totalorder %s140, 15
        %s142 = scalar_select %p141, %s140, 15
        %s143 = smul.addr %s142, 4
        %s144 = scalar_lea.vmem %s1, %s143
        %s145 = smul.u32 16, %s19
      $region16: #{gcn_compress_forward.2} parent=11 // pred_fallthru
        _
      // Predicated region
      $region17: #{gcn_compress_forward.2} parent=11 // pred_check
        %p146 = pneg %p96
      $region18: #{gcn_compress_forward.2} parent=11 // pred_check_branch
        %148 = sbr.rel (%p146) target = $region20
      $region19: #{gcn_compress_forward.2} parent=11 // pred_region
        _
      $region20: #{gcn_compress_forward.2} parent=11 // pred_fallthru
        _
    $region12: #{gcn_compress_forward.2} parent=5 // pred_fallthru
      _
    %p149 = scmp.lt.s32.totalorder %s9, 2
    // Predicated region
    $region21: #{gcn_compress_forward.2} parent=5 // pred_check
      %p150 = pneg %p149
    $region22: #{gcn_compress_forward.2} parent=5 // pred_check_branch
      %152 = sbr.rel (%p150) target = $region24
    $region23: #{gcn_compress_forward.2} parent=5 // pred_region
      // Predicated region
      $region25: #{gcn_compress_forward.2} parent=23 // pred_check
        %p153 = pneg %p43
      $region26: #{gcn_compress_forward.2} parent=23 // pred_check_branch
        %155 = sbr.rel (%p153) target = $region28
      $region27: #{gcn_compress_forward.2} parent=23 // pred_region
        %s156 = smul.u32 8, %s16
        %p157 = scmp.lt.s32.totalorder %s156, 15
        %s158 = scalar_select %p157, %s156, 15
        %p159 = scmp.lt.s32.totalorder %s17, 0
        %s160 = scalar_select %p159, %s17, 0
        %s161 = sadd.s32 %s160, %s158
        %s162 = smul.addr %s161, 4
        %s163 = scalar_lea.vmem %s0, %s162
        %s164 = smul.u32 8, %s16
      $region28: #{gcn_compress_forward.2} parent=23 // pred_fallthru
        _
    $region24: #{gcn_compress_forward.2} parent=5 // pred_fallthru
      _
    %p165 = scmp.le.s32.totalorder 1, %s9
    %p166 = scmp.lt.s32.totalorder %s9, 3
    %p167 = pnand %p165, %p166
    %p168 = pneg %p167
    // Predicated region
    $region29: #{gcn_compress_forward.2} parent=5 // pred_check
      _
    $region30: #{gcn_compress_forward.2} parent=5 // pred_check_branch
      %170 = sbr.rel (%p167) target = $region32
    $region31: #{gcn_compress_forward.2} parent=5 // pred_region
      %s171 = ssub.s32 %s9, 1
      %s172 = smul.u32 8, %s18
      %p173 = scmp.lt.s32.totalorder %s172, 15
      %s174 = scalar_select %p173, %s172, 15
      %p175 = scmp.lt.s32.totalorder %s19, 0
      %s176 = scalar_select %p175, %s19, 0
      %s177 = sadd.s32 %s176, %s174
      %s178 = smul.addr %s177, 4
      %s179 = scalar_lea.vmem %s0, %s178
      %p180 = pneg %p49
      %p181 = pneg %p46
      %s182 = smul.u32 16, %s19
      %p183 = scmp.lt.s32.totalorder %s182, 15
      %s184 = scalar_select %p183, %s182, 15
      %s185 = smul.addr %s184, 4
      %s186 = scalar_lea.vmem %s1, %s185
      %p187 = pneg %p75
      %p188 = pneg %p72
      %p189 = pneg %p96
      %p190 = pneg %p93
      %p191 = pneg %p122
      %p192 = pneg %p119
      %s193 = smul.u32 8, %s18
      %p194 = scmp.lt.s32.totalorder %s193, 15
      %s195 = scalar_select %p194, %s193, 15
      %s196 = smul.addr %s195, 4
      %s197 = scalar_lea.vmem %s3, %s196
      %s198 = smul.u32 8, %s18
      %p199 = scmp.lt.s32.totalorder %s198, 15
      %s200 = scalar_select %p199, %s198, 15
      %p201 = scmp.lt.s32.totalorder %s19, 0
      %s202 = scalar_select %p201, %s19, 0
      %s203 = sadd.s32 %s202, %s200
      %s204 = smul.addr %s203, 4
      %s205 = scalar_lea.vmem %s0, %s204
      %s206 = smul.u32 8, %s18
      %s207 = smul.u32 16, %s19
      %p208 = scmp.lt.s32.totalorder %s207, 15
      %s209 = scalar_select %p208, %s207, 15
      %s210 = smul.addr %s209, 4
      %s211 = scalar_lea.vmem %s1, %s210
      %s212 = smul.u32 16, %s19
      %s213 = smul.u32 8, %s18
      %p214 = scmp.lt.s32.totalorder %s213, 15
      %s215 = scalar_select %p214, %s213, 15
      %s216 = smul.addr %s215, 4
      %s217 = scalar_lea.vmem %s3, %s216
      %s218 = smul.u32 8, %s18
      %p220 = scmp.eq.s32.totalorder %s19, 0
      // Predicated region
      $region33: #{gcn_compress_forward.2} parent=31 // pred_check
        %p221 = pneg %p220
      $region34: #{gcn_compress_forward.2} parent=31 // pred_check_branch
        %223 = sbr.rel (%p221) target = $region36
      $region35: #{gcn_compress_forward.2} parent=31 // pred_region
        %224 = vst [vmem:[#allocation2] sm:$0xff] 0.0
        %225 = vst [vmem:[#allocation2 + $0x8] sm:$0xff] 0.0
        %226 = vst [vmem:[#allocation2 + $0x10] sm:$0xff] 0.0
        %227 = vst [vmem:[#allocation2 + $0x18] sm:$0xff] 0.0
        %228 = vst [vmem:[#allocation2 + $0x20] sm:$0xff] 0.0
        %229 = vst [vmem:[#allocation2 + $0x28] sm:$0xff] 0.0
        %230 = vst [vmem:[#allocation2 + $0x30] sm:$0xff] 0.0
        %231 = vst [vmem:[#allocation2 + $0x38] sm:$0xff] 0.0
      $region36: #{gcn_compress_forward.2} parent=31 // pred_fallthru
        _
      %v232 = vld [vmem:[#allocation2] sm:$0xff]
      %v233 = vld [vmem:[#allocation2 + $0x8] sm:$0xff]
      %v234 = vld [vmem:[#allocation2 + $0x10] sm:$0xff]
      %v235 = vld [vmem:[#allocation2 + $0x18] sm:$0xff]
      %v236 = vld [vmem:[#allocation2 + $0x20] sm:$0xff]
      %v237 = vld [vmem:[#allocation2 + $0x28] sm:$0xff]
      %v238 = vld [vmem:[#allocation2 + $0x30] sm:$0xff]
      %v239 = vld [vmem:[#allocation2 + $0x38] sm:$0xff]
      %v240 = vld [vmem:[%s205] sm:$0xf]
      %v241 = vld [vmem:[%s205 + $0x4] sm:$0xf]
      %v242 = vld [vmem:[%s205 + $0x8] sm:$0xf]
      %v243 = vld [vmem:[%s205 + $0xc] sm:$0xf]
      %v244 = vld [vmem:[%s205 + $0x10] sm:$0xf]
      %v245 = vld [vmem:[%s205 + $0x14] sm:$0xf]
      %v246 = vld [vmem:[%s205 + $0x18] sm:$0xf]
      %v247 = vld [vmem:[%s205 + $0x1c] sm:$0xf]
      %v248 = vld [vmem:[%s211] sm:$0xf]
      %v249 = vld [vmem:[%s211 + $0x4] sm:$0xf]
      %v250 = vld [vmem:[%s211 + $0x8] sm:$0xf]
      %v251 = vld [vmem:[%s211 + $0xc] sm:$0xf]
      %v252 = vld [vmem:[%s211 + $0x10] sm:$0xf]
      %v253 = vld [vmem:[%s211 + $0x14] sm:$0xf]
      %v254 = vld [vmem:[%s211 + $0x18] sm:$0xf]
      %v255 = vld [vmem:[%s211 + $0x1c] sm:$0xf]
      %v256 = vld [vmem:[%s211 + $0x20] sm:$0xf]
      %v257 = vld [vmem:[%s211 + $0x24] sm:$0xf]
      %v258 = vld [vmem:[%s211 + $0x28] sm:$0xf]
      %v259 = vld [vmem:[%s211 + $0x2c] sm:$0xf]
      %v260 = vld [vmem:[%s211 + $0x30] sm:$0xf]
      %v261 = vld [vmem:[%s211 + $0x34] sm:$0xf]
      %v262 = vld [vmem:[%s211 + $0x38] sm:$0xf]
      %v263 = vld [vmem:[%s211 + $0x3c] sm:$0xf]
      %v272 = vunpack.c.l.b16 %v240
      %v273 = vunpack.c.l.b16 %v241
      %v274 = vunpack.c.l.b16 %v242
      %v275 = vunpack.c.l.b16 %v243
      %v276 = vunpack.c.l.b16 %v244
      %v277 = vunpack.c.l.b16 %v245
      %v278 = vunpack.c.l.b16 %v246
      %v279 = vunpack.c.l.b16 %v247
      %v280 = vpack.c.b16 %v273, %v272
      %v281 = vpack.c.b16 %v275, %v274
      %v282 = vpack.c.b16 %v277, %v276
      %v283 = vpack.c.b16 %v279, %v278
      %v304 = vunpack.c.l.b16 %v248
      %v305 = vunpack.c.l.b16 %v249
      %v306 = vunpack.c.l.b16 %v250
      %v307 = vunpack.c.l.b16 %v251
      %v308 = vunpack.c.l.b16 %v252
      %v309 = vunpack.c.l.b16 %v253
      %v310 = vunpack.c.l.b16 %v254
      %v311 = vunpack.c.l.b16 %v255
      %v312 = vunpack.c.l.b16 %v256
      %v313 = vunpack.c.l.b16 %v257
      %v314 = vunpack.c.l.b16 %v258
      %v315 = vunpack.c.l.b16 %v259
      %v316 = vunpack.c.l.b16 %v260
      %v317 = vunpack.c.l.b16 %v261
      %v318 = vunpack.c.l.b16 %v262
      %v319 = vunpack.c.l.b16 %v263
      %v320 = vpack.c.b16 %v305, %v304
      %v321 = vpack.c.b16 %v307, %v306
      %v322 = vpack.c.b16 %v309, %v308
      %v323 = vpack.c.b16 %v311, %v310
      %v324 = vpack.c.b16 %v313, %v312
      %v325 = vpack.c.b16 %v315, %v314
      %v326 = vpack.c.b16 %v317, %v316
      %v327 = vpack.c.b16 %v319, %v318
      %336 = vmatprep.subr.bf16.mxu0 0
      %337 = vmatpush1.bf16.msra.mxu0 %v327
      %338 = vmatprep.subr.bf16.mxu0 0
      %339 = vmatpush1.bf16.msra.mxu0 %v326
      %340 = vmatprep.subr.bf16.mxu0 0
      %341 = vmatpush1.bf16.msra.mxu0 %v325
      %342 = vmatprep.subr.bf16.mxu0 0
      %343 = vmatpush1.bf16.msra.mxu0 %v324
      %344 = vmatprep.subr.bf16.mxu0 0
      %345 = vmatpush1.bf16.msra.mxu0 %v323
      %346 = vmatprep.subr.bf16.mxu0 0
      %347 = vmatpush1.bf16.msra.mxu0 %v322
      %348 = vmatprep.subr.bf16.mxu0 0
      %349 = vmatpush1.bf16.msra.mxu0 %v321
      %350 = vmatprep.subr.bf16.mxu0 0
      %351 = vmatpush1.bf16.msra.mxu0 %v320
      %352 = vmatprep.subr.bf16.mxu0 0
      %353 = vmatpush2.bf16.msra.mxu0 0
      %354 = vmatprep.subr.bf16.mxu0 0
      %355 = vmatpush2.bf16.msra.mxu0 0
      %356 = vmatprep.subr.bf16.mxu0 0
      %357 = vmatpush2.bf16.msra.mxu0 0
      %358 = vmatprep.subr.bf16.mxu0 0
      %359 = vmatpush2.bf16.msra.mxu0 0
      %360 = vmatprep.subr.bf16.mxu0 0
      %361 = vmatpush2.bf16.msra.mxu0 0
      %362 = vmatprep.subr.bf16.mxu0 0
      %363 = vmatpush2.bf16.msra.mxu0 0
      %364 = vmatprep.subr.bf16.mxu0 0
      %365 = vmatpush2.bf16.msra.mxu0 0
      %366 = vmatprep.subr.bf16.mxu0 0
      %367 = vmatpush2.bf16.msra.mxu0 0
      %368 = vmatprep.mubr.bf16.mxu0 0
      %369 = vmatmul.mubr.bf16.gmra.mxu0 %v280
      %v370 = vpop.f32.mrf.mxu0
      %v371 = vadd.f32 0.0, %v370
      %v372 = vpop.f32.mrf.mxu0
      %v373 = vpop.f32.mrf.mxu0
      %v374 = vadd.f32 0.0, %v373
      %v375 = vpop.f32.mrf.mxu0
      %376 = vmatprep.mubr.bf16.mxu0 0
      %377 = vmatmul.mubr.bf16.gmra.mxu0 %v281
      %v378 = vpop.f32.mrf.mxu0
      %v379 = vadd.f32 0.0, %v378
      %v380 = vpop.f32.mrf.mxu0
      %v381 = vpop.f32.mrf.mxu0
      %v382 = vadd.f32 0.0, %v381
      %v383 = vpop.f32.mrf.mxu0
      %384 = vmatprep.mubr.bf16.mxu0 0
      %385 = vmatmul.mubr.bf16.gmra.mxu0 %v282
      %v386 = vpop.f32.mrf.mxu0
      %v387 = vadd.f32 0.0, %v386
      %v388 = vpop.f32.mrf.mxu0
      %v389 = vpop.f32.mrf.mxu0
      %v390 = vadd.f32 0.0, %v389
      %v391 = vpop.f32.mrf.mxu0
      %392 = vmatprep.mubr.bf16.mxu0 0
      %393 = vmatmul.mubr.bf16.gmra.mxu0 %v283
      %v394 = vpop.f32.mrf.mxu0
      %v395 = vadd.f32 0.0, %v394
      %v396 = vpop.f32.mrf.mxu0
      %v397 = vpop.f32.mrf.mxu0
      %v398 = vadd.f32 0.0, %v397
      %v399 = vpop.f32.mrf.mxu0
      %400 = vdwg.mxu0
      %v401 = vadd.f32 %v232, %v371
      %v402 = vadd.f32 %v233, %v374
      %v403 = vadd.f32 %v234, %v379
      %v404 = vadd.f32 %v235, %v382
      %v405 = vadd.f32 %v236, %v387
      %v406 = vadd.f32 %v237, %v390
      %v407 = vadd.f32 %v238, %v395
      %v408 = vadd.f32 %v239, %v398
      %409 = vst [vmem:[#allocation2] sm:$0xff] %v401
      %410 = vst [vmem:[#allocation2 + $0x8] sm:$0xff] %v402
      %411 = vst [vmem:[#allocation2 + $0x10] sm:$0xff] %v403
      %412 = vst [vmem:[#allocation2 + $0x18] sm:$0xff] %v404
      %413 = vst [vmem:[#allocation2 + $0x20] sm:$0xff] %v405
      %414 = vst [vmem:[#allocation2 + $0x28] sm:$0xff] %v406
      %415 = vst [vmem:[#allocation2 + $0x30] sm:$0xff] %v407
      %416 = vst [vmem:[#allocation2 + $0x38] sm:$0xff] %v408
      // Predicated region
      $region37: #{gcn_compress_forward.2} parent=31 // pred_check
        %p417 = pneg %p220
      $region38: #{gcn_compress_forward.2} parent=31 // pred_check_branch
        %419 = sbr.rel (%p417) target = $region40
      $region39: #{gcn_compress_forward.2} parent=31 // pred_region
        %v420 = vld [vmem:[#allocation2] sm:$0xff]
        %v421 = vld [vmem:[#allocation2 + $0x8] sm:$0xff]
        %v422 = vld [vmem:[#allocation2 + $0x10] sm:$0xff]
        %v423 = vld [vmem:[#allocation2 + $0x18] sm:$0xff]
        %v424 = vld [vmem:[#allocation2 + $0x20] sm:$0xff]
        %v425 = vld [vmem:[#allocation2 + $0x28] sm:$0xff]
        %v426 = vld [vmem:[#allocation2 + $0x30] sm:$0xff]
        %v427 = vld [vmem:[#allocation2 + $0x38] sm:$0xff]
        %v428 = vpack.c.bf16 %v421, %v420
        %v429 = vpack.c.bf16 %v423, %v422
        %v430 = vpack.c.bf16 %v425, %v424
        %v431 = vpack.c.bf16 %v427, %v426
        %v432 = vld [vmem:[%s2] sm:$0xf]
        %v433 = vld [vmem:[%s2 + $0x4] sm:$0xf]
        %v434 = vld [vmem:[%s2 + $0x8] sm:$0xf]
        %v435 = vld [vmem:[%s2 + $0xc] sm:$0xf]
        %v436 = vld [vmem:[%s2 + $0x10] sm:$0xf]
        %v437 = vld [vmem:[%s2 + $0x14] sm:$0xf]
        %v438 = vld [vmem:[%s2 + $0x18] sm:$0xf]
        %v439 = vld [vmem:[%s2 + $0x1c] sm:$0xf]
        %v440 = vld [vmem:[%s2 + $0x20] sm:$0xf]
        %v441 = vld [vmem:[%s2 + $0x24] sm:$0xf]
        %v442 = vld [vmem:[%s2 + $0x28] sm:$0xf]
        %v443 = vld [vmem:[%s2 + $0x2c] sm:$0xf]
        %v444 = vld [vmem:[%s2 + $0x30] sm:$0xf]
        %v445 = vld [vmem:[%s2 + $0x34] sm:$0xf]
        %v446 = vld [vmem:[%s2 + $0x38] sm:$0xf]
        %v447 = vld [vmem:[%s2 + $0x3c] sm:$0xf]
        %v464 = vunpack.c.l.b16 %v432
        %v465 = vunpack.c.l.b16 %v433
        %v466 = vunpack.c.l.b16 %v434
        %v467 = vunpack.c.l.b16 %v435
        %v468 = vunpack.c.l.b16 %v436
        %v469 = vunpack.c.l.b16 %v437
        %v470 = vunpack.c.l.b16 %v438
        %v471 = vunpack.c.l.b16 %v439
        %v472 = vunpack.c.l.b16 %v440
        %v473 = vunpack.c.l.b16 %v441
        %v474 = vunpack.c.l.b16 %v442
        %v475 = vunpack.c.l.b16 %v443
        %v476 = vunpack.c.l.b16 %v444
        %v477 = vunpack.c.l.b16 %v445
        %v478 = vunpack.c.l.b16 %v446
        %v479 = vunpack.c.l.b16 %v447
        %v480 = vpack.c.b16 %v465, %v464
        %v481 = vpack.c.b16 %v467, %v466
        %v482 = vpack.c.b16 %v469, %v468
        %v483 = vpack.c.b16 %v471, %v470
        %v484 = vpack.c.b16 %v473, %v472
        %v485 = vpack.c.b16 %v475, %v474
        %v486 = vpack.c.b16 %v477, %v476
        %v487 = vpack.c.b16 %v479, %v478
        %496 = vmatprep.subr.bf16.mxu0 0
        %497 = vmatpush1.bf16.msra.mxu0 %v487
        %498 = vmatprep.subr.bf16.mxu0 0
        %499 = vmatpush1.bf16.msra.mxu0 %v486
        %500 = vmatprep.subr.bf16.mxu0 0
        %501 = vmatpush1.bf16.msra.mxu0 %v485
        %502 = vmatprep.subr.bf16.mxu0 0
        %503 = vmatpush1.bf16.msra.mxu0 %v484
        %504 = vmatprep.subr.bf16.mxu0 0
        %505 = vmatpush1.bf16.msra.mxu0 %v483
        %506 = vmatprep.subr.bf16.mxu0 0
        %507 = vmatpush1.bf16.msra.mxu0 %v482
        %508 = vmatprep.subr.bf16.mxu0 0
        %509 = vmatpush1.bf16.msra.mxu0 %v481
        %510 = vmatprep.subr.bf16.mxu0 0
        %511 = vmatpush1.bf16.msra.mxu0 %v480
        %512 = vmatprep.subr.bf16.mxu0 0
        %513 = vmatpush2.bf16.msra.mxu0 0
        %514 = vmatprep.subr.bf16.mxu0 0
        %515 = vmatpush2.bf16.msra.mxu0 0
        %516 = vmatprep.subr.bf16.mxu0 0
        %517 = vmatpush2.bf16.msra.mxu0 0
        %518 = vmatprep.subr.bf16.mxu0 0
        %519 = vmatpush2.bf16.msra.mxu0 0
        %520 = vmatprep.subr.bf16.mxu0 0
        %521 = vmatpush2.bf16.msra.mxu0 0
        %522 = vmatprep.subr.bf16.mxu0 0
        %523 = vmatpush2.bf16.msra.mxu0 0
        %524 = vmatprep.subr.bf16.mxu0 0
        %525 = vmatpush2.bf16.msra.mxu0 0
        %526 = vmatprep.subr.bf16.mxu0 0
        %527 = vmatpush2.bf16.msra.mxu0 0
        %528 = vmatprep.mubr.bf16.mxu0 0
        %529 = vmatmul.mubr.bf16.gmra.mxu0 %v428
        %v530 = vpop.f32.mrf.mxu0
        %v531 = vadd.f32 0.0, %v530
        %v532 = vpop.f32.mrf.mxu0
        %v533 = vpop.f32.mrf.mxu0
        %v534 = vadd.f32 0.0, %v533
        %v535 = vpop.f32.mrf.mxu0
        %536 = vmatprep.mubr.bf16.mxu0 0
        %537 = vmatmul.mubr.bf16.gmra.mxu0 %v429
        %v538 = vpop.f32.mrf.mxu0
        %v539 = vadd.f32 0.0, %v538
        %v540 = vpop.f32.mrf.mxu0
        %v541 = vpop.f32.mrf.mxu0
        %v542 = vadd.f32 0.0, %v541
        %v543 = vpop.f32.mrf.mxu0
        %544 = vmatprep.mubr.bf16.mxu0 0
        %545 = vmatmul.mubr.bf16.gmra.mxu0 %v430
        %v546 = vpop.f32.mrf.mxu0
        %v547 = vadd.f32 0.0, %v546
        %v548 = vpop.f32.mrf.mxu0
        %v549 = vpop.f32.mrf.mxu0
        %v550 = vadd.f32 0.0, %v549
        %v551 = vpop.f32.mrf.mxu0
        %552 = vmatprep.mubr.bf16.mxu0 0
        %553 = vmatmul.mubr.bf16.gmra.mxu0 %v431
        %v554 = vpop.f32.mrf.mxu0
        %v555 = vadd.f32 0.0, %v554
        %v556 = vpop.f32.mrf.mxu0
        %v557 = vpop.f32.mrf.mxu0
        %v558 = vadd.f32 0.0, %v557
        %v559 = vpop.f32.mrf.mxu0
        %560 = vdwg.mxu0
        %v561 = vpack.c.bf16 %v534, %v531
        %v562 = vpack.c.bf16 %v542, %v539
        %v563 = vpack.c.bf16 %v550, %v547
        %v564 = vpack.c.bf16 %v558, %v555
        %v569 = vunpack.c.l.b16 %v561
        %v570 = vunpack.c.h.b16 %v561
        %v571 = vunpack.c.l.b16 %v562
        %v572 = vunpack.c.h.b16 %v562
        %v573 = vunpack.c.l.b16 %v563
        %v574 = vunpack.c.h.b16 %v563
        %v575 = vunpack.c.l.b16 %v564
        %v576 = vunpack.c.h.b16 %v564
        %v577 = vpack.c.b16 %v569, %v569
        %v578 = vpack.c.b16 %v570, %v570
        %v579 = vpack.c.b16 %v571, %v571
        %v580 = vpack.c.b16 %v572, %v572
        %v581 = vpack.c.b16 %v573, %v573
        %v582 = vpack.c.b16 %v574, %v574
        %v583 = vpack.c.b16 %v575, %v575
        %v584 = vpack.c.b16 %v576, %v576
        %593 = vst [vmem:[%s217] sm:$0xf] %v577
        %594 = vst [vmem:[%s217 + $0x4] sm:$0xf] %v578
        %595 = vst [vmem:[%s217 + $0x8] sm:$0xf] %v579
        %596 = vst [vmem:[%s217 + $0xc] sm:$0xf] %v580
        %597 = vst [vmem:[%s217 + $0x10] sm:$0xf] %v581
        %598 = vst [vmem:[%s217 + $0x14] sm:$0xf] %v582
        %599 = vst [vmem:[%s217 + $0x18] sm:$0xf] %v583
        %600 = vst [vmem:[%s217 + $0x1c] sm:$0xf] %v584
      $region40: #{gcn_compress_forward.2} parent=31 // pred_fallthru
        _
      %s601 = smul.u32 8, %s18
      %p602 = scmp.lt.s32.totalorder %s601, 15
      %s603 = scalar_select %p602, %s601, 15
      %s604 = smul.addr %s603, 4
      %s605 = scalar_lea.vmem %s3, %s604
      // Predicated region
      $region41: #{gcn_compress_forward.2} parent=31 // pred_check
        %p606 = pneg %p119
      $region42: #{gcn_compress_forward.2} parent=31 // pred_check_branch
        %608 = sbr.rel (%p606) target = $region44
      $region43: #{gcn_compress_forward.2} parent=31 // pred_region
        %s609 = smul.u32 8, %s18
      $region44: #{gcn_compress_forward.2} parent=31 // pred_fallthru
        _
    $region32: #{gcn_compress_forward.2} parent=5 // pred_fallthru
      _
    %p610 = scmp.le.s32.totalorder 2, %s9
    // Predicated region
    $region45: #{gcn_compress_forward.2} parent=5 // pred_check
      %p611 = pneg %p610
    $region46: #{gcn_compress_forward.2} parent=5 // pred_check_branch
      %613 = sbr.rel (%p611) target = $region48
    $region47: #{gcn_compress_forward.2} parent=5 // pred_region
      %s614 = ssub.s32 %s9, 2
      // Predicated region
      $region49: #{gcn_compress_forward.2} parent=47 // pred_check
        %p615 = pneg %p125
      $region50: #{gcn_compress_forward.2} parent=47 // pred_check_branch
        %617 = sbr.rel (%p615) target = $region52
      $region51: #{gcn_compress_forward.2} parent=47 // pred_region
        %s618 = smul.u32 8, %s20
        %p619 = scmp.lt.s32.totalorder %s618, 15
        %s620 = scalar_select %p619, %s618, 15
        %s621 = smul.addr %s620, 4
        %s622 = scalar_lea.vmem %s3, %s621
      $region52: #{gcn_compress_forward.2} parent=47 // pred_fallthru
        _
    $region48: #{gcn_compress_forward.2} parent=5 // pred_fallthru
      _
  $region6: #{gcn_compress_forward.2} parent=0 // loop_footer
    %s13 = sadd.s32 1, %s9
  $region7: #{gcn_compress_forward.2} parent=0 // loop_footer_branch
    %8 = sbr.rel target = $region3
  $region8: #{gcn_compress_forward.2} parent=0 // loop_exit
    _

</llo_original>
